<compile_context>
chip_gen: v6e
topology: v6e:2x2x1
jax: 0.10.0
libtpu: 0.0.40
codegen_flags: <defaults>
</compile_context>

<pallas_src>
import jax
import jax.numpy as jnp
from jax.experimental import pallas as pl
from jax.experimental.pallas import tpu as pltpu


def _round_up(x, m):
    return ((x + m - 1) // m) * m


def _compl_mul_kernel(x_ref, w_ref, o_ref):
    """One grid step == one (mode-corner, S-tile, Cout-tile).

    x_ref: (2, 1, B, Cin_p, ts)    real/imag of the truncated spectrum
    w_ref: (2, 1, Cin_p, tco, ts)  real/imag of the spectral weights
    o_ref: (2, 1, B, tco, ts)      real/imag of the output spectrum

    out[b,o,s] = sum_i x[b,i,s] * w[i,o,s]   (complex MAC over in-channels)

    The Cin reduction is a fully-unrolled static loop accumulating into two
    (B, tco, ts) f32 values, bounding the live set (no Cin-sized broadcast).
    """
    b = x_ref.shape[2]
    cin_p = x_ref.shape[3]
    ts = x_ref.shape[4]
    tco = w_ref.shape[3]

    acc_r = jnp.zeros((b, tco, ts), jnp.float32)
    acc_i = jnp.zeros((b, tco, ts), jnp.float32)

    for ci in range(cin_p):                        # static, fully unrolled
        xr = x_ref[0, 0, :, ci, :][:, None, :]     # (B, 1, ts)
        xi = x_ref[1, 0, :, ci, :][:, None, :]
        wr = w_ref[0, 0, ci, :, :][None, :, :]     # (1, tco, ts)
        wi = w_ref[1, 0, ci, :, :][None, :, :]
        acc_r = acc_r + (xr * wr - xi * wi)
        acc_i = acc_i + (xr * wi + xi * wr)

    o_ref[0, 0] = acc_r
    o_ref[1, 0] = acc_i


def _spectral_mul_pallas(x_ri, w_ri, tco, ts, vmem_limit_bytes):
    """x_ri: (2, 4, B, Cin_p, S_p) f32 ; w_ri: (2, 4, Cin_p, Cout_p, S_p) f32
       returns out_ri: (2, 4, B, Cout_p, S_p) f32"""
    _, ncorner, B, cin_p, s_p = x_ri.shape
    cout_p = w_ri.shape[3]

    grid = (ncorner, s_p // ts, cout_p // tco)     # cout innermost -> x block reused

    x_spec = pl.BlockSpec((2, 1, B, cin_p, ts), lambda c, si, co: (0, c, 0, 0, si))
    w_spec = pl.BlockSpec((2, 1, cin_p, tco, ts), lambda c, si, co: (0, c, 0, co, si))
    o_spec = pl.BlockSpec((2, 1, B, tco, ts), lambda c, si, co: (0, c, 0, co, si))

    return pl.pallas_call(
        _compl_mul_kernel,
        out_shape=jax.ShapeDtypeStruct((2, ncorner, B, cout_p, s_p), jnp.float32),
        grid=grid,
        in_specs=[x_spec, w_spec],
        out_specs=o_spec,
        compiler_params=pltpu.CompilerParams(
            dimension_semantics=("parallel", "parallel", "parallel"),
            vmem_limit_bytes=int(vmem_limit_bytes)),
    )(x_ri, w_ri)


def spectral_conv3d(x, weights):
    """x: (B, Cin, D1, D2, D3) float32
       weights: (4, Cin, Cout, m1, m2, m3) complex64  (weights1..weights4)
       returns: (B, Cout, D1, D2, D3) float32"""
    B, Cin, D1, D2, D3 = x.shape
    _, _, Cout, m1, m2, m3 = weights.shape
    Wz = D3 // 2 + 1
    S = m1 * m2 * m3
    assert m1 <= D1 and m2 <= D2 and m3 <= Wz, "modes exceed spectrum size"

    # ---- generation-aware tile / padding plan --------------------------------
    try:
        vmem_cap = pltpu.get_tpu_info().vmem_capacity_bytes
    except Exception:
        vmem_cap = 64 << 20                    # conservative (v7x-sized) fallback
    vmem_limit = min(vmem_cap * 3 // 4, 96 << 20)
    budget = vmem_limit // 2                   # per-step block budget (incl. 2x buffering)

    cin_p = _round_up(Cin, 8)                  # sublane-dense channels
    cout_p = _round_up(Cout, 8)
    s_p = _round_up(S, 128)                    # lane-dense flattened modes

    tco = min(cout_p, 128)
    ts = min(s_p, 1024)

    def _fp(tc, t):                            # double-buffered per-step bytes
        xb = 2 * B * cin_p * t * 4
        wb = 2 * cin_p * tc * t * 4
        ob = 2 * B * tc * t * 4
        return 2 * (xb + wb + ob)

    if _fp(tco, ts) > budget:                  # shrink lane tile (×128 multiples)
        ts = 1024
        while ts > 128 and _fp(tco, ts) > budget:
            ts //= 2
    while tco > 8 and _fp(tco, ts) > budget:   # then shrink Cout tile (×8 multiples)
        tco = _round_up(tco // 2, 8)

    cout_p = _round_up(Cout, tco)
    s_p = _round_up(S, ts)

    # ---- forward real FFT + corner gather (plain JAX) -------------------------
    # TODO(synk): FFT/IFFT have no Pallas TPU primitive; computed with jnp.fft.
    x_ft = jnp.fft.rfftn(x, axes=(-3, -2, -1))            # (B, Cin, D1, D2, Wz) c64

    corners = jnp.stack(
        [x_ft[:, :, :m1, :m2, :m3],
         x_ft[:, :, D1 - m1:, :m2, :m3],
         x_ft[:, :, :m1, D2 - m2:, :m3],
         x_ft[:, :, D1 - m1:, D2 - m2:, :m3]],
        axis=0)                                            # (4, B, Cin, m1, m2, m3)

    x_ri = jnp.stack([jnp.real(corners), jnp.imag(corners)], axis=0)
    x_ri = x_ri.astype(jnp.float32).reshape(2, 4, B, Cin, S)
    x_ri = jnp.pad(x_ri, ((0, 0), (0, 0), (0, 0),
                          (0, cin_p - Cin), (0, s_p - S)))

    w_ri = jnp.stack([jnp.real(weights), jnp.imag(weights)], axis=0)
    w_ri = w_ri.astype(jnp.float32).reshape(2, 4, Cin, Cout, S)
    w_ri = jnp.pad(w_ri, ((0, 0), (0, 0), (0, cin_p - Cin),
                          (0, cout_p - Cout), (0, s_p - S)))

    out_ri = _spectral_mul_pallas(x_ri, w_ri, tco, ts, vmem_limit)

    out_ri = out_ri[:, :, :, :Cout, :S].reshape(2, 4, B, Cout, m1, m2, m3)
    out_c = (out_ri[0] + 1j * out_ri[1]).astype(jnp.complex64)

    # scatter corners into the (otherwise zero) output spectrum — same write
    # order as the PyTorch module.
    out_ft = jnp.zeros((B, Cout, D1, D2, Wz), dtype=jnp.complex64)
    out_ft = out_ft.at[:, :, :m1, :m2, :m3].set(out_c[0])
    out_ft = out_ft.at[:, :, D1 - m1:, :m2, :m3].set(out_c[1])
    out_ft = out_ft.at[:, :, :m1, D2 - m2:, :m3].set(out_c[2])
    out_ft = out_ft.at[:, :, D1 - m1:, D2 - m2:, :m3].set(out_c[3])

    # inverse real FFT back to physical space
    x_out = jnp.fft.irfftn(out_ft, s=(D1, D2, D3), axes=(-3, -2, -1))
    return x_out.astype(jnp.float32)


def _reference(x, weights):
    """Pure-JAX reference mirroring the PyTorch forward (for validation)."""
    B, Cin, D1, D2, D3 = x.shape
    _, _, Cout, m1, m2, m3 = weights.shape
    Wz = D3 // 2 + 1
    x_ft = jnp.fft.rfftn(x, axes=(-3, -2, -1))

    def cmul(inp, w):
        return jnp.einsum('bixyz,ioxyz->boxyz', inp, w)

    out_ft = jnp.zeros((B, Cout, D1, D2, Wz), dtype=jnp.complex64)
    out_ft = out_ft.at[:, :, :m1, :m2, :m3].set(
        cmul(x_ft[:, :, :m1, :m2, :m3], weights[0]))
    out_ft = out_ft.at[:, :, D1 - m1:, :m2, :m3].set(
        cmul(x_ft[:, :, D1 - m1:, :m2, :m3], weights[1]))
    out_ft = out_ft.at[:, :, :m1, D2 - m2:, :m3].set(
        cmul(x_ft[:, :, :m1, D2 - m2:, :m3], weights[2]))
    out_ft = out_ft.at[:, :, D1 - m1:, D2 - m2:, :m3].set(
        cmul(x_ft[:, :, D1 - m1:, D2 - m2:, :m3], weights[3]))
    return jnp.fft.irfftn(out_ft, s=(D1, D2, D3), axes=(-3, -2, -1)).astype(jnp.float32)


if __name__ == "__main__":
    # Small shapes consistent with the module.
    B, Cin, Cout = 2, 4, 4
    D1 = D2 = D3 = 16
    m1, m2, m3 = 4, 4, 3

    key = jax.random.PRNGKey(0)
    kx, kwr, kwi = jax.random.split(key, 3)

    x = jax.random.normal(kx, (B, Cin, D1, D2, D3), dtype=jnp.float32)

    # Deterministic init mirroring `scale * torch.rand(..., dtype=cfloat)`:
    # uniform [0,1) real and imaginary parts, scaled by 1/(Cin*Cout).
    scale = 1.0 / (Cin * Cout)
    w_real = scale * jax.random.uniform(kwr, (4, Cin, Cout, m1, m2, m3), dtype=jnp.float32)
    w_imag = scale * jax.random.uniform(kwi, (4, Cin, Cout, m1, m2, m3), dtype=jnp.float32)
    weights = (w_real + 1j * w_imag).astype(jnp.complex64)

    y = spectral_conv3d(x, weights)
    y = jax.block_until_ready(y)

    y_ref = jax.block_until_ready(_reference(x, weights))
    assert y.shape == (B, Cout, D1, D2, D3)
    assert jnp.max(jnp.abs(y - y_ref)) < 1e-4, "mismatch vs pure-JAX reference"

    print("KERNEL_OK")
</pallas_src>

<mosaic_0001>
module attributes {stable_mosaic.version = 11 : i64} {
  func.func @_compl_mul_kernel(%arg0: i32, %arg1: i32, %arg2: i32, %arg3: memref<2x1x2x8x128xf32, #tpu.memory_space<vmem>>, %arg4: memref<2x1x8x8x128xf32, #tpu.memory_space<vmem>>, %arg5: memref<2x1x2x8x128xf32, #tpu.memory_space<vmem>>) attributes {dimension_semantics = [#tpu.dimension_semantics<parallel>, #tpu.dimension_semantics<parallel>, #tpu.dimension_semantics<parallel>], iteration_bounds = array<i64: 4, 1, 1>, scalar_prefetch = 0 : i64, scratch_operands = 0 : i64, tpu.core_type = #tpu.core_type<tc>, window_params = [{transform_indices = @transform_0, window_bounds = array<i64: 2, 1, 2, 8, 128>}, {transform_indices = @transform_1, window_bounds = array<i64: 2, 1, 8, 8, 128>}, {transform_indices = @transform_2, window_bounds = array<i64: 2, 1, 2, 8, 128>}]} {
    %cst = arith.constant 0.000000e+00 : f32
    %0 = vector.broadcast %cst : f32 to vector<2x8x128xf32>
    %cst_0 = arith.constant 0.000000e+00 : f32
    %1 = vector.broadcast %cst_0 : f32 to vector<2x8x128xf32>
    %c0 = arith.constant 0 : index
    %c0_1 = arith.constant 0 : index
    %c0_2 = arith.constant 0 : index
    %c0_3 = arith.constant 0 : index
    %c0_4 = arith.constant 0 : index
    %2 = vector.load %arg3[%c0, %c0_1, %c0_2, %c0_3, %c0_4] : memref<2x1x2x8x128xf32, #tpu.memory_space<vmem>>, vector<1x1x2x1x128xf32>
    %3 = vector.shape_cast %2 : vector<1x1x2x1x128xf32> to vector<2x128xf32>
    %4 = vector.shape_cast %3 : vector<2x128xf32> to vector<2x1x128xf32>
    %c1 = arith.constant 1 : index
    %c0_5 = arith.constant 0 : index
    %c0_6 = arith.constant 0 : index
    %c0_7 = arith.constant 0 : index
    %c0_8 = arith.constant 0 : index
    %5 = vector.load %arg3[%c1, %c0_5, %c0_6, %c0_7, %c0_8] : memref<2x1x2x8x128xf32, #tpu.memory_space<vmem>>, vector<1x1x2x1x128xf32>
    %6 = vector.shape_cast %5 : vector<1x1x2x1x128xf32> to vector<2x128xf32>
    %7 = vector.shape_cast %6 : vector<2x128xf32> to vector<2x1x128xf32>
    %c0_9 = arith.constant 0 : index
    %c0_10 = arith.constant 0 : index
    %c0_11 = arith.constant 0 : index
    %c0_12 = arith.constant 0 : index
    %c0_13 = arith.constant 0 : index
    %8 = vector.load %arg4[%c0_9, %c0_10, %c0_11, %c0_12, %c0_13] : memref<2x1x8x8x128xf32, #tpu.memory_space<vmem>>, vector<1x1x1x8x128xf32>
    %9 = vector.shape_cast %8 : vector<1x1x1x8x128xf32> to vector<8x128xf32>
    %10 = vector.shape_cast %9 : vector<8x128xf32> to vector<1x8x128xf32>
    %c1_14 = arith.constant 1 : index
    %c0_15 = arith.constant 0 : index
    %c0_16 = arith.constant 0 : index
    %c0_17 = arith.constant 0 : index
    %c0_18 = arith.constant 0 : index
    %11 = vector.load %arg4[%c1_14, %c0_15, %c0_16, %c0_17, %c0_18] : memref<2x1x8x8x128xf32, #tpu.memory_space<vmem>>, vector<1x1x1x8x128xf32>
    %12 = vector.shape_cast %11 : vector<1x1x1x8x128xf32> to vector<8x128xf32>
    %13 = vector.shape_cast %12 : vector<8x128xf32> to vector<1x8x128xf32>
    %14 = vector.broadcast %4 : vector<2x1x128xf32> to vector<2x8x128xf32>
    %15 = vector.broadcast %10 : vector<1x8x128xf32> to vector<2x8x128xf32>
    %16 = arith.mulf %14, %15 : vector<2x8x128xf32>
    %17 = vector.broadcast %7 : vector<2x1x128xf32> to vector<2x8x128xf32>
    %18 = vector.broadcast %13 : vector<1x8x128xf32> to vector<2x8x128xf32>
    %19 = arith.mulf %17, %18 : vector<2x8x128xf32>
    %20 = arith.subf %16, %19 : vector<2x8x128xf32>
    %21 = arith.addf %0, %20 : vector<2x8x128xf32>
    %22 = vector.broadcast %4 : vector<2x1x128xf32> to vector<2x8x128xf32>
    %23 = vector.broadcast %13 : vector<1x8x128xf32> to vector<2x8x128xf32>
    %24 = arith.mulf %22, %23 : vector<2x8x128xf32>
    %25 = vector.broadcast %7 : vector<2x1x128xf32> to vector<2x8x128xf32>
    %26 = vector.broadcast %10 : vector<1x8x128xf32> to vector<2x8x128xf32>
    %27 = arith.mulf %25, %26 : vector<2x8x128xf32>
    %28 = arith.addf %24, %27 : vector<2x8x128xf32>
    %29 = arith.addf %1, %28 : vector<2x8x128xf32>
    %c0_19 = arith.constant 0 : index
    %c0_20 = arith.constant 0 : index
    %c0_21 = arith.constant 0 : index
    %c1_22 = arith.constant 1 : index
    %c0_23 = arith.constant 0 : index
    %30 = vector.load %arg3[%c0_19, %c0_20, %c0_21, %c1_22, %c0_23] : memref<2x1x2x8x128xf32, #tpu.memory_space<vmem>>, vector<1x1x2x1x128xf32>
    %31 = vector.shape_cast %30 : vector<1x1x2x1x128xf32> to vector<2x128xf32>
    %32 = vector.shape_cast %31 : vector<2x128xf32> to vector<2x1x128xf32>
    %c1_24 = arith.constant 1 : index
    %c0_25 = arith.constant 0 : index
    %c0_26 = arith.constant 0 : index
    %c1_27 = arith.constant 1 : index
    %c0_28 = arith.constant 0 : index
    %33 = vector.load %arg3[%c1_24, %c0_25, %c0_26, %c1_27, %c0_28] : memref<2x1x2x8x128xf32, #tpu.memory_space<vmem>>, vector<1x1x2x1x128xf32>
    %34 = vector.shape_cast %33 : vector<1x1x2x1x128xf32> to vector<2x128xf32>
    %35 = vector.shape_cast %34 : vector<2x128xf32> to vector<2x1x128xf32>
    %c0_29 = arith.constant 0 : index
    %c0_30 = arith.constant 0 : index
    %c1_31 = arith.constant 1 : index
    %c0_32 = arith.constant 0 : index
    %c0_33 = arith.constant 0 : index
    %36 = vector.load %arg4[%c0_29, %c0_30, %c1_31, %c0_32, %c0_33] : memref<2x1x8x8x128xf32, #tpu.memory_space<vmem>>, vector<1x1x1x8x128xf32>
    %37 = vector.shape_cast %36 : vector<1x1x1x8x128xf32> to vector<8x128xf32>
    %38 = vector.shape_cast %37 : vector<8x128xf32> to vector<1x8x128xf32>
    %c1_34 = arith.constant 1 : index
    %c0_35 = arith.constant 0 : index
    %c1_36 = arith.constant 1 : index
    %c0_37 = arith.constant 0 : index
    %c0_38 = arith.constant 0 : index
    %39 = vector.load %arg4[%c1_34, %c0_35, %c1_36, %c0_37, %c0_38] : memref<2x1x8x8x128xf32, #tpu.memory_space<vmem>>, vector<1x1x1x8x128xf32>
    %40 = vector.shape_cast %39 : vector<1x1x1x8x128xf32> to vector<8x128xf32>
    %41 = vector.shape_cast %40 : vector<8x128xf32> to vector<1x8x128xf32>
    %42 = vector.broadcast %32 : vector<2x1x128xf32> to vector<2x8x128xf32>
    %43 = vector.broadcast %38 : vector<1x8x128xf32> to vector<2x8x128xf32>
    %44 = arith.mulf %42, %43 : vector<2x8x128xf32>
    %45 = vector.broadcast %35 : vector<2x1x128xf32> to vector<2x8x128xf32>
    %46 = vector.broadcast %41 : vector<1x8x128xf32> to vector<2x8x128xf32>
    %47 = arith.mulf %45, %46 : vector<2x8x128xf32>
    %48 = arith.subf %44, %47 : vector<2x8x128xf32>
    %49 = arith.addf %21, %48 : vector<2x8x128xf32>
    %50 = vector.broadcast %32 : vector<2x1x128xf32> to vector<2x8x128xf32>
    %51 = vector.broadcast %41 : vector<1x8x128xf32> to vector<2x8x128xf32>
    %52 = arith.mulf %50, %51 : vector<2x8x128xf32>
    %53 = vector.broadcast %35 : vector<2x1x128xf32> to vector<2x8x128xf32>
    %54 = vector.broadcast %38 : vector<1x8x128xf32> to vector<2x8x128xf32>
    %55 = arith.mulf %53, %54 : vector<2x8x128xf32>
    %56 = arith.addf %52, %55 : vector<2x8x128xf32>
    %57 = arith.addf %29, %56 : vector<2x8x128xf32>
    %c0_39 = arith.constant 0 : index
    %c0_40 = arith.constant 0 : index
    %c0_41 = arith.constant 0 : index
    %c2 = arith.constant 2 : index
    %c0_42 = arith.constant 0 : index
    %58 = vector.load %arg3[%c0_39, %c0_40, %c0_41, %c2, %c0_42] : memref<2x1x2x8x128xf32, #tpu.memory_space<vmem>>, vector<1x1x2x1x128xf32>
    %59 = vector.shape_cast %58 : vector<1x1x2x1x128xf32> to vector<2x128xf32>
    %60 = vector.shape_cast %59 : vector<2x128xf32> to vector<2x1x128xf32>
    %c1_43 = arith.constant 1 : index
    %c0_44 = arith.constant 0 : index
    %c0_45 = arith.constant 0 : index
    %c2_46 = arith.constant 2 : index
    %c0_47 = arith.constant 0 : index
    %61 = vector.load %arg3[%c1_43, %c0_44, %c0_45, %c2_46, %c0_47] : memref<2x1x2x8x128xf32, #tpu.memory_space<vmem>>, vector<1x1x2x1x128xf32>
    %62 = vector.shape_cast %61 : vector<1x1x2x1x128xf32> to vector<2x128xf32>
    %63 = vector.shape_cast %62 : vector<2x128xf32> to vector<2x1x128xf32>
    %c0_48 = arith.constant 0 : index
    %c0_49 = arith.constant 0 : index
    %c2_50 = arith.constant 2 : index
    %c0_51 = arith.constant 0 : index
    %c0_52 = arith.constant 0 : index
    %64 = vector.load %arg4[%c0_48, %c0_49, %c2_50, %c0_51, %c0_52] : memref<2x1x8x8x128xf32, #tpu.memory_space<vmem>>, vector<1x1x1x8x128xf32>
    %65 = vector.shape_cast %64 : vector<1x1x1x8x128xf32> to vector<8x128xf32>
    %66 = vector.shape_cast %65 : vector<8x128xf32> to vector<1x8x128xf32>
    %c1_53 = arith.constant 1 : index
    %c0_54 = arith.constant 0 : index
    %c2_55 = arith.constant 2 : index
    %c0_56 = arith.constant 0 : index
    %c0_57 = arith.constant 0 : index
    %67 = vector.load %arg4[%c1_53, %c0_54, %c2_55, %c0_56, %c0_57] : memref<2x1x8x8x128xf32, #tpu.memory_space<vmem>>, vector<1x1x1x8x128xf32>
    %68 = vector.shape_cast %67 : vector<1x1x1x8x128xf32> to vector<8x128xf32>
    %69 = vector.shape_cast %68 : vector<8x128xf32> to vector<1x8x128xf32>
    %70 = vector.broadcast %60 : vector<2x1x128xf32> to vector<2x8x128xf32>
    %71 = vector.broadcast %66 : vector<1x8x128xf32> to vector<2x8x128xf32>
    %72 = arith.mulf %70, %71 : vector<2x8x128xf32>
    %73 = vector.broadcast %63 : vector<2x1x128xf32> to vector<2x8x128xf32>
    %74 = vector.broadcast %69 : vector<1x8x128xf32> to vector<2x8x128xf32>
    %75 = arith.mulf %73, %74 : vector<2x8x128xf32>
    %76 = arith.subf %72, %75 : vector<2x8x128xf32>
    %77 = arith.addf %49, %76 : vector<2x8x128xf32>
    %78 = vector.broadcast %60 : vector<2x1x128xf32> to vector<2x8x128xf32>
    %79 = vector.broadcast %69 : vector<1x8x128xf32> to vector<2x8x128xf32>
    %80 = arith.mulf %78, %79 : vector<2x8x128xf32>
    %81 = vector.broadcast %63 : vector<2x1x128xf32> to vector<2x8x128xf32>
    %82 = vector.broadcast %66 : vector<1x8x128xf32> to vector<2x8x128xf32>
    %83 = arith.mulf %81, %82 : vector<2x8x128xf32>
    %84 = arith.addf %80, %83 : vector<2x8x128xf32>
    %85 = arith.addf %57, %84 : vector<2x8x128xf32>
    %c0_58 = arith.constant 0 : index
    %c0_59 = arith.constant 0 : index
    %c0_60 = arith.constant 0 : index
    %c3 = arith.constant 3 : index
    %c0_61 = arith.constant 0 : index
    %86 = vector.load %arg3[%c0_58, %c0_59, %c0_60, %c3, %c0_61] : memref<2x1x2x8x128xf32, #tpu.memory_space<vmem>>, vector<1x1x2x1x128xf32>
    %87 = vector.shape_cast %86 : vector<1x1x2x1x128xf32> to vector<2x128xf32>
    %88 = vector.shape_cast %87 : vector<2x128xf32> to vector<2x1x128xf32>
    %c1_62 = arith.constant 1 : index
    %c0_63 = arith.constant 0 : index
    %c0_64 = arith.constant 0 : index
    %c3_65 = arith.constant 3 : index
    %c0_66 = arith.constant 0 : index
    %89 = vector.load %arg3[%c1_62, %c0_63, %c0_64, %c3_65, %c0_66] : memref<2x1x2x8x128xf32, #tpu.memory_space<vmem>>, vector<1x1x2x1x128xf32>
    %90 = vector.shape_cast %89 : vector<1x1x2x1x128xf32> to vector<2x128xf32>
    %91 = vector.shape_cast %90 : vector<2x128xf32> to vector<2x1x128xf32>
    %c0_67 = arith.constant 0 : index
    %c0_68 = arith.constant 0 : index
    %c3_69 = arith.constant 3 : index
    %c0_70 = arith.constant 0 : index
    %c0_71 = arith.constant 0 : index
    %92 = vector.load %arg4[%c0_67, %c0_68, %c3_69, %c0_70, %c0_71] : memref<2x1x8x8x128xf32, #tpu.memory_space<vmem>>, vector<1x1x1x8x128xf32>
    %93 = vector.shape_cast %92 : vector<1x1x1x8x128xf32> to vector<8x128xf32>
    %94 = vector.shape_cast %93 : vector<8x128xf32> to vector<1x8x128xf32>
    %c1_72 = arith.constant 1 : index
    %c0_73 = arith.constant 0 : index
    %c3_74 = arith.constant 3 : index
    %c0_75 = arith.constant 0 : index
    %c0_76 = arith.constant 0 : index
    %95 = vector.load %arg4[%c1_72, %c0_73, %c3_74, %c0_75, %c0_76] : memref<2x1x8x8x128xf32, #tpu.memory_space<vmem>>, vector<1x1x1x8x128xf32>
    %96 = vector.shape_cast %95 : vector<1x1x1x8x128xf32> to vector<8x128xf32>
    %97 = vector.shape_cast %96 : vector<8x128xf32> to vector<1x8x128xf32>
    %98 = vector.broadcast %88 : vector<2x1x128xf32> to vector<2x8x128xf32>
    %99 = vector.broadcast %94 : vector<1x8x128xf32> to vector<2x8x128xf32>
    %100 = arith.mulf %98, %99 : vector<2x8x128xf32>
    %101 = vector.broadcast %91 : vector<2x1x128xf32> to vector<2x8x128xf32>
    %102 = vector.broadcast %97 : vector<1x8x128xf32> to vector<2x8x128xf32>
    %103 = arith.mulf %101, %102 : vector<2x8x128xf32>
    %104 = arith.subf %100, %103 : vector<2x8x128xf32>
    %105 = arith.addf %77, %104 : vector<2x8x128xf32>
    %106 = vector.broadcast %88 : vector<2x1x128xf32> to vector<2x8x128xf32>
    %107 = vector.broadcast %97 : vector<1x8x128xf32> to vector<2x8x128xf32>
    %108 = arith.mulf %106, %107 : vector<2x8x128xf32>
    %109 = vector.broadcast %91 : vector<2x1x128xf32> to vector<2x8x128xf32>
    %110 = vector.broadcast %94 : vector<1x8x128xf32> to vector<2x8x128xf32>
    %111 = arith.mulf %109, %110 : vector<2x8x128xf32>
    %112 = arith.addf %108, %111 : vector<2x8x128xf32>
    %113 = arith.addf %85, %112 : vector<2x8x128xf32>
    %c0_77 = arith.constant 0 : index
    %c0_78 = arith.constant 0 : index
    %c0_79 = arith.constant 0 : index
    %c4 = arith.constant 4 : index
    %c0_80 = arith.constant 0 : index
    %114 = vector.load %arg3[%c0_77, %c0_78, %c0_79, %c4, %c0_80] : memref<2x1x2x8x128xf32, #tpu.memory_space<vmem>>, vector<1x1x2x1x128xf32>
    %115 = vector.shape_cast %114 : vector<1x1x2x1x128xf32> to vector<2x128xf32>
    %116 = vector.shape_cast %115 : vector<2x128xf32> to vector<2x1x128xf32>
    %c1_81 = arith.constant 1 : index
    %c0_82 = arith.constant 0 : index
    %c0_83 = arith.constant 0 : index
    %c4_84 = arith.constant 4 : index
    %c0_85 = arith.constant 0 : index
    %117 = vector.load %arg3[%c1_81, %c0_82, %c0_83, %c4_84, %c0_85] : memref<2x1x2x8x128xf32, #tpu.memory_space<vmem>>, vector<1x1x2x1x128xf32>
    %118 = vector.shape_cast %117 : vector<1x1x2x1x128xf32> to vector<2x128xf32>
    %119 = vector.shape_cast %118 : vector<2x128xf32> to vector<2x1x128xf32>
    %c0_86 = arith.constant 0 : index
    %c0_87 = arith.constant 0 : index
    %c4_88 = arith.constant 4 : index
    %c0_89 = arith.constant 0 : index
    %c0_90 = arith.constant 0 : index
    %120 = vector.load %arg4[%c0_86, %c0_87, %c4_88, %c0_89, %c0_90] : memref<2x1x8x8x128xf32, #tpu.memory_space<vmem>>, vector<1x1x1x8x128xf32>
    %121 = vector.shape_cast %120 : vector<1x1x1x8x128xf32> to vector<8x128xf32>
    %122 = vector.shape_cast %121 : vector<8x128xf32> to vector<1x8x128xf32>
    %c1_91 = arith.constant 1 : index
    %c0_92 = arith.constant 0 : index
    %c4_93 = arith.constant 4 : index
    %c0_94 = arith.constant 0 : index
    %c0_95 = arith.constant 0 : index
    %123 = vector.load %arg4[%c1_91, %c0_92, %c4_93, %c0_94, %c0_95] : memref<2x1x8x8x128xf32, #tpu.memory_space<vmem>>, vector<1x1x1x8x128xf32>
    %124 = vector.shape_cast %123 : vector<1x1x1x8x128xf32> to vector<8x128xf32>
    %125 = vector.shape_cast %124 : vector<8x128xf32> to vector<1x8x128xf32>
    %126 = vector.broadcast %116 : vector<2x1x128xf32> to vector<2x8x128xf32>
    %127 = vector.broadcast %122 : vector<1x8x128xf32> to vector<2x8x128xf32>
    %128 = arith.mulf %126, %127 : vector<2x8x128xf32>
    %129 = vector.broadcast %119 : vector<2x1x128xf32> to vector<2x8x128xf32>
    %130 = vector.broadcast %125 : vector<1x8x128xf32> to vector<2x8x128xf32>
    %131 = arith.mulf %129, %130 : vector<2x8x128xf32>
    %132 = arith.subf %128, %131 : vector<2x8x128xf32>
    %133 = arith.addf %105, %132 : vector<2x8x128xf32>
    %134 = vector.broadcast %116 : vector<2x1x128xf32> to vector<2x8x128xf32>
    %135 = vector.broadcast %125 : vector<1x8x128xf32> to vector<2x8x128xf32>
    %136 = arith.mulf %134, %135 : vector<2x8x128xf32>
    %137 = vector.broadcast %119 : vector<2x1x128xf32> to vector<2x8x128xf32>
    %138 = vector.broadcast %122 : vector<1x8x128xf32> to vector<2x8x128xf32>
    %139 = arith.mulf %137, %138 : vector<2x8x128xf32>
    %140 = arith.addf %136, %139 : vector<2x8x128xf32>
    %141 = arith.addf %113, %140 : vector<2x8x128xf32>
    %c0_96 = arith.constant 0 : index
    %c0_97 = arith.constant 0 : index
    %c0_98 = arith.constant 0 : index
    %c5 = arith.constant 5 : index
    %c0_99 = arith.constant 0 : index
    %142 = vector.load %arg3[%c0_96, %c0_97, %c0_98, %c5, %c0_99] : memref<2x1x2x8x128xf32, #tpu.memory_space<vmem>>, vector<1x1x2x1x128xf32>
    %143 = vector.shape_cast %142 : vector<1x1x2x1x128xf32> to vector<2x128xf32>
    %144 = vector.shape_cast %143 : vector<2x128xf32> to vector<2x1x128xf32>
    %c1_100 = arith.constant 1 : index
    %c0_101 = arith.constant 0 : index
    %c0_102 = arith.constant 0 : index
    %c5_103 = arith.constant 5 : index
    %c0_104 = arith.constant 0 : index
    %145 = vector.load %arg3[%c1_100, %c0_101, %c0_102, %c5_103, %c0_104] : memref<2x1x2x8x128xf32, #tpu.memory_space<vmem>>, vector<1x1x2x1x128xf32>
    %146 = vector.shape_cast %145 : vector<1x1x2x1x128xf32> to vector<2x128xf32>
    %147 = vector.shape_cast %146 : vector<2x128xf32> to vector<2x1x128xf32>
    %c0_105 = arith.constant 0 : index
    %c0_106 = arith.constant 0 : index
    %c5_107 = arith.constant 5 : index
    %c0_108 = arith.constant 0 : index
    %c0_109 = arith.constant 0 : index
    %148 = vector.load %arg4[%c0_105, %c0_106, %c5_107, %c0_108, %c0_109] : memref<2x1x8x8x128xf32, #tpu.memory_space<vmem>>, vector<1x1x1x8x128xf32>
    %149 = vector.shape_cast %148 : vector<1x1x1x8x128xf32> to vector<8x128xf32>
    %150 = vector.shape_cast %149 : vector<8x128xf32> to vector<1x8x128xf32>
    %c1_110 = arith.constant 1 : index
    %c0_111 = arith.constant 0 : index
    %c5_112 = arith.constant 5 : index
    %c0_113 = arith.constant 0 : index
    %c0_114 = arith.constant 0 : index
    %151 = vector.load %arg4[%c1_110, %c0_111, %c5_112, %c0_113, %c0_114] : memref<2x1x8x8x128xf32, #tpu.memory_space<vmem>>, vector<1x1x1x8x128xf32>
    %152 = vector.shape_cast %151 : vector<1x1x1x8x128xf32> to vector<8x128xf32>
    %153 = vector.shape_cast %152 : vector<8x128xf32> to vector<1x8x128xf32>
    %154 = vector.broadcast %144 : vector<2x1x128xf32> to vector<2x8x128xf32>
    %155 = vector.broadcast %150 : vector<1x8x128xf32> to vector<2x8x128xf32>
    %156 = arith.mulf %154, %155 : vector<2x8x128xf32>
    %157 = vector.broadcast %147 : vector<2x1x128xf32> to vector<2x8x128xf32>
    %158 = vector.broadcast %153 : vector<1x8x128xf32> to vector<2x8x128xf32>
    %159 = arith.mulf %157, %158 : vector<2x8x128xf32>
    %160 = arith.subf %156, %159 : vector<2x8x128xf32>
    %161 = arith.addf %133, %160 : vector<2x8x128xf32>
    %162 = vector.broadcast %144 : vector<2x1x128xf32> to vector<2x8x128xf32>
    %163 = vector.broadcast %153 : vector<1x8x128xf32> to vector<2x8x128xf32>
    %164 = arith.mulf %162, %163 : vector<2x8x128xf32>
    %165 = vector.broadcast %147 : vector<2x1x128xf32> to vector<2x8x128xf32>
    %166 = vector.broadcast %150 : vector<1x8x128xf32> to vector<2x8x128xf32>
    %167 = arith.mulf %165, %166 : vector<2x8x128xf32>
    %168 = arith.addf %164, %167 : vector<2x8x128xf32>
    %169 = arith.addf %141, %168 : vector<2x8x128xf32>
    %c0_115 = arith.constant 0 : index
    %c0_116 = arith.constant 0 : index
    %c0_117 = arith.constant 0 : index
    %c6 = arith.constant 6 : index
    %c0_118 = arith.constant 0 : index
    %170 = vector.load %arg3[%c0_115, %c0_116, %c0_117, %c6, %c0_118] : memref<2x1x2x8x128xf32, #tpu.memory_space<vmem>>, vector<1x1x2x1x128xf32>
    %171 = vector.shape_cast %170 : vector<1x1x2x1x128xf32> to vector<2x128xf32>
    %172 = vector.shape_cast %171 : vector<2x128xf32> to vector<2x1x128xf32>
    %c1_119 = arith.constant 1 : index
    %c0_120 = arith.constant 0 : index
    %c0_121 = arith.constant 0 : index
    %c6_122 = arith.constant 6 : index
    %c0_123 = arith.constant 0 : index
    %173 = vector.load %arg3[%c1_119, %c0_120, %c0_121, %c6_122, %c0_123] : memref<2x1x2x8x128xf32, #tpu.memory_space<vmem>>, vector<1x1x2x1x128xf32>
    %174 = vector.shape_cast %173 : vector<1x1x2x1x128xf32> to vector<2x128xf32>
    %175 = vector.shape_cast %174 : vector<2x128xf32> to vector<2x1x128xf32>
    %c0_124 = arith.constant 0 : index
    %c0_125 = arith.constant 0 : index
    %c6_126 = arith.constant 6 : index
    %c0_127 = arith.constant 0 : index
    %c0_128 = arith.constant 0 : index
    %176 = vector.load %arg4[%c0_124, %c0_125, %c6_126, %c0_127, %c0_128] : memref<2x1x8x8x128xf32, #tpu.memory_space<vmem>>, vector<1x1x1x8x128xf32>
    %177 = vector.shape_cast %176 : vector<1x1x1x8x128xf32> to vector<8x128xf32>
    %178 = vector.shape_cast %177 : vector<8x128xf32> to vector<1x8x128xf32>
    %c1_129 = arith.constant 1 : index
    %c0_130 = arith.constant 0 : index
    %c6_131 = arith.constant 6 : index
    %c0_132 = arith.constant 0 : index
    %c0_133 = arith.constant 0 : index
    %179 = vector.load %arg4[%c1_129, %c0_130, %c6_131, %c0_132, %c0_133] : memref<2x1x8x8x128xf32, #tpu.memory_space<vmem>>, vector<1x1x1x8x128xf32>
    %180 = vector.shape_cast %179 : vector<1x1x1x8x128xf32> to vector<8x128xf32>
    %181 = vector.shape_cast %180 : vector<8x128xf32> to vector<1x8x128xf32>
    %182 = vector.broadcast %172 : vector<2x1x128xf32> to vector<2x8x128xf32>
    %183 = vector.broadcast %178 : vector<1x8x128xf32> to vector<2x8x128xf32>
    %184 = arith.mulf %182, %183 : vector<2x8x128xf32>
    %185 = vector.broadcast %175 : vector<2x1x128xf32> to vector<2x8x128xf32>
    %186 = vector.broadcast %181 : vector<1x8x128xf32> to vector<2x8x128xf32>
    %187 = arith.mulf %185, %186 : vector<2x8x128xf32>
    %188 = arith.subf %184, %187 : vector<2x8x128xf32>
    %189 = arith.addf %161, %188 : vector<2x8x128xf32>
    %190 = vector.broadcast %172 : vector<2x1x128xf32> to vector<2x8x128xf32>
    %191 = vector.broadcast %181 : vector<1x8x128xf32> to vector<2x8x128xf32>
    %192 = arith.mulf %190, %191 : vector<2x8x128xf32>
    %193 = vector.broadcast %175 : vector<2x1x128xf32> to vector<2x8x128xf32>
    %194 = vector.broadcast %178 : vector<1x8x128xf32> to vector<2x8x128xf32>
    %195 = arith.mulf %193, %194 : vector<2x8x128xf32>
    %196 = arith.addf %192, %195 : vector<2x8x128xf32>
    %197 = arith.addf %169, %196 : vector<2x8x128xf32>
    %c0_134 = arith.constant 0 : index
    %c0_135 = arith.constant 0 : index
    %c0_136 = arith.constant 0 : index
    %c7 = arith.constant 7 : index
    %c0_137 = arith.constant 0 : index
    %198 = vector.load %arg3[%c0_134, %c0_135, %c0_136, %c7, %c0_137] : memref<2x1x2x8x128xf32, #tpu.memory_space<vmem>>, vector<1x1x2x1x128xf32>
    %199 = vector.shape_cast %198 : vector<1x1x2x1x128xf32> to vector<2x128xf32>
    %200 = vector.shape_cast %199 : vector<2x128xf32> to vector<2x1x128xf32>
    %c1_138 = arith.constant 1 : index
    %c0_139 = arith.constant 0 : index
    %c0_140 = arith.constant 0 : index
    %c7_141 = arith.constant 7 : index
    %c0_142 = arith.constant 0 : index
    %201 = vector.load %arg3[%c1_138, %c0_139, %c0_140, %c7_141, %c0_142] : memref<2x1x2x8x128xf32, #tpu.memory_space<vmem>>, vector<1x1x2x1x128xf32>
    %202 = vector.shape_cast %201 : vector<1x1x2x1x128xf32> to vector<2x128xf32>
    %203 = vector.shape_cast %202 : vector<2x128xf32> to vector<2x1x128xf32>
    %c0_143 = arith.constant 0 : index
    %c0_144 = arith.constant 0 : index
    %c7_145 = arith.constant 7 : index
    %c0_146 = arith.constant 0 : index
    %c0_147 = arith.constant 0 : index
    %204 = vector.load %arg4[%c0_143, %c0_144, %c7_145, %c0_146, %c0_147] : memref<2x1x8x8x128xf32, #tpu.memory_space<vmem>>, vector<1x1x1x8x128xf32>
    %205 = vector.shape_cast %204 : vector<1x1x1x8x128xf32> to vector<8x128xf32>
    %206 = vector.shape_cast %205 : vector<8x128xf32> to vector<1x8x128xf32>
    %c1_148 = arith.constant 1 : index
    %c0_149 = arith.constant 0 : index
    %c7_150 = arith.constant 7 : index
    %c0_151 = arith.constant 0 : index
    %c0_152 = arith.constant 0 : index
    %207 = vector.load %arg4[%c1_148, %c0_149, %c7_150, %c0_151, %c0_152] : memref<2x1x8x8x128xf32, #tpu.memory_space<vmem>>, vector<1x1x1x8x128xf32>
    %208 = vector.shape_cast %207 : vector<1x1x1x8x128xf32> to vector<8x128xf32>
    %209 = vector.shape_cast %208 : vector<8x128xf32> to vector<1x8x128xf32>
    %210 = vector.broadcast %200 : vector<2x1x128xf32> to vector<2x8x128xf32>
    %211 = vector.broadcast %206 : vector<1x8x128xf32> to vector<2x8x128xf32>
    %212 = arith.mulf %210, %211 : vector<2x8x128xf32>
    %213 = vector.broadcast %203 : vector<2x1x128xf32> to vector<2x8x128xf32>
    %214 = vector.broadcast %209 : vector<1x8x128xf32> to vector<2x8x128xf32>
    %215 = arith.mulf %213, %214 : vector<2x8x128xf32>
    %216 = arith.subf %212, %215 : vector<2x8x128xf32>
    %217 = arith.addf %189, %216 : vector<2x8x128xf32>
    %218 = vector.broadcast %200 : vector<2x1x128xf32> to vector<2x8x128xf32>
    %219 = vector.broadcast %209 : vector<1x8x128xf32> to vector<2x8x128xf32>
    %220 = arith.mulf %218, %219 : vector<2x8x128xf32>
    %221 = vector.broadcast %203 : vector<2x1x128xf32> to vector<2x8x128xf32>
    %222 = vector.broadcast %206 : vector<1x8x128xf32> to vector<2x8x128xf32>
    %223 = arith.mulf %221, %222 : vector<2x8x128xf32>
    %224 = arith.addf %220, %223 : vector<2x8x128xf32>
    %225 = arith.addf %197, %224 : vector<2x8x128xf32>
    %c0_153 = arith.constant 0 : index
    %c0_154 = arith.constant 0 : index
    %c0_155 = arith.constant 0 : index
    %c0_156 = arith.constant 0 : index
    %c0_157 = arith.constant 0 : index
    %226 = vector.load %arg5[%c0_153, %c0_154, %c0_155, %c0_156, %c0_157] : memref<2x1x2x8x128xf32, #tpu.memory_space<vmem>>, vector<1x1x2x8x128xf32>
    %227 = vector.shape_cast %226 : vector<1x1x2x8x128xf32> to vector<2x8x128xf32>
    %228 = vector.shape_cast %217 : vector<2x8x128xf32> to vector<1x1x2x8x128xf32>
    tpu.vector_store %arg5[%c0_153, %c0_154, %c0_155, %c0_156, %c0_157], %228 {strides = array<i32>} : memref<2x1x2x8x128xf32, #tpu.memory_space<vmem>>, vector<1x1x2x8x128xf32>,
    %c1_158 = arith.constant 1 : index
    %c0_159 = arith.constant 0 : index
    %c0_160 = arith.constant 0 : index
    %c0_161 = arith.constant 0 : index
    %c0_162 = arith.constant 0 : index
    %229 = vector.load %arg5[%c1_158, %c0_159, %c0_160, %c0_161, %c0_162] : memref<2x1x2x8x128xf32, #tpu.memory_space<vmem>>, vector<1x1x2x8x128xf32>
    %230 = vector.shape_cast %229 : vector<1x1x2x8x128xf32> to vector<2x8x128xf32>
    %231 = vector.shape_cast %225 : vector<2x8x128xf32> to vector<1x1x2x8x128xf32>
    tpu.vector_store %arg5[%c1_158, %c0_159, %c0_160, %c0_161, %c0_162], %231 {strides = array<i32>} : memref<2x1x2x8x128xf32, #tpu.memory_space<vmem>>, vector<1x1x2x8x128xf32>,
    return
  }
  func.func @transform_0(%arg0: i32, %arg1: i32, %arg2: i32) -> (i32, i32, i32, i32, i32) {
    %c0_i32 = arith.constant 0 : i32
    %c0_i32_0 = arith.constant 0 : i32
    %c0_i32_1 = arith.constant 0 : i32
    %c0_i32_2 = arith.constant 0 : i32
    return %c0_i32, %arg0, %c0_i32_0, %c0_i32_1, %arg1 : i32, i32, i32, i32, i32
  }
  func.func @transform_1(%arg0: i32, %arg1: i32, %arg2: i32) -> (i32, i32, i32, i32, i32) {
    %c0_i32 = arith.constant 0 : i32
    %c0_i32_0 = arith.constant 0 : i32
    %c0_i32_1 = arith.constant 0 : i32
    return %c0_i32, %arg0, %c0_i32_0, %arg2, %arg1 : i32, i32, i32, i32, i32
  }
  func.func @transform_2(%arg0: i32, %arg1: i32, %arg2: i32) -> (i32, i32, i32, i32, i32) {
    %c0_i32 = arith.constant 0 : i32
    %c0_i32_0 = arith.constant 0 : i32
    %c0_i32_1 = arith.constant 0 : i32
    return %c0_i32, %arg0, %c0_i32_0, %arg2, %arg1 : i32, i32, i32, i32, i32
  }
}

</mosaic_0001>

<llo_original>
// kernel: tpu_custom_call.1
$region0: #{tpu_custom_call.1}
  #allocation0 [shape = 'u32[]', space=smem, size = 0x4, offset = 0x4, fixed_abs, tag = 'smem constant byte address 0x4 - core index']
  #allocation1 [shape = 'u32[144,128]{1,0:T(1,128)}', space=vmem, size = 0x12000, scoped, tag = 'internal scratch']
  #allocation8 [shape = 's32[]', space=sflag, size = 0x4, offset = 0, fixed_abs, tag = 'sflag constant byte address 0x0 - dummy sync flag']
  #allocation10 [shape = 's32[]', space=sflag, size = 0x4, offset = 0, fixed_abs, tag = 'sflag constant byte address 0x0 - dummy sync flag']
  #allocation12 [shape = 's32[]', space=sflag, size = 0x4, offset = 0, fixed_abs, tag = 'sflag constant byte address 0x0 - dummy sync flag']
  %s0 = inlined_call_operand.hbm [shape: f32[2,4,2,8,128], index: 0, kind: input, shape index: {}]
  %s1 = inlined_call_operand.hbm [shape: f32[2,4,8,8,128], index: 1, kind: input, shape index: {}]
  %s2 = inlined_call_operand.hbm [shape: f32[2,4,2,8,128], index: 2, kind: output, shape index: {}]
  %s3 = sld [smem:[#allocation0]]
  $region49: #{tpu_custom_call.1} parent=0
    _
  %s5 = ssub.s32 1, %s3
  %s6 = scalar_select 0, %s5, %s3
  $region1: #{tpu_custom_call.1} parent=0
    #allocation2 [shape = 'u8[32768]{0}', space=vmem, size = 0x8000, scoped, tag = 'input window, operand 0']
    #allocation3 [shape = 's32[2]{0}', space=sflag, size = 0x8, scoped, tag = 'scoped memory for tpu_custom_call.1']
    #allocation4 [shape = 's32[2]{0}', space=sflag, size = 0x8, scoped, tag = 'scoped memory for tpu_custom_call.1']
    #allocation5 [shape = 'u8[131072]{0}', space=vmem, size = 0x20000, scoped, tag = 'input window, operand 1']
    #allocation6 [shape = 's32[2]{0}', space=sflag, size = 0x8, scoped, tag = 'scoped memory for tpu_custom_call.1']
    #allocation7 [shape = 'u8[32768]{0}', space=vmem, size = 0x8000, scoped, tag = 'output window, operand 0']
    %7 = vsyncpa [#allocation3], 0
    %s8 = scalar_lea.sflag [#allocation3], 1
    %9 = vsyncpa %s8, 0
    %10 = vsyncpa [#allocation6], 0
    %s11 = scalar_lea.sflag [#allocation6], 1
    %12 = vsyncpa %s11, 0
    %13 = vsyncpa [#allocation4], 0
    %s14 = scalar_lea.sflag [#allocation4], 1
    %15 = vsyncpa %s14, 0
    loop: start=0, step=1, limit=6
    $region2: #{tpu_custom_call.1} parent=1 // loop_pre_header
      _
    $region3: #{tpu_custom_call.1} parent=1 // loop_header
      %s17 = sphi 0, %s21
      %p18 = scmp.ge.s32.totalorder %s17, 6
      %s24 = sphi 0, %s43
      %s25 = sphi 0, %s39
      %s26 = sphi 0, %s35
      %s27 = sphi 0, %s24
      %s28 = sphi 0, %s25
      %s29 = sphi 0, %s26
      %s30 = sphi 0, %s27
      %s31 = sphi 0, %s28
      %s32 = sphi 0, %s29
      %s48 = sphi 0, %s50
      %s51 = sphi 0, %s48
      %s52 = sphi 0, %s51
      %s68 = sphi 0, %s52
      %s78 = sphi 0, %s80
      %s81 = sphi 0, %s78
      %s82 = sphi 0, %s81
      %s98 = sphi 0, %s82
      %s108 = sphi 0, %s110
      %s111 = sphi 0, %s108
      %s112 = sphi 0, %s111
      %s128 = sphi 0, %s112
    $region4: #{tpu_custom_call.1} parent=1 // loop_header_branch
      %20 = sbr.rel (%p18) target = $region8
    $region5: #{tpu_custom_call.1} parent=1 // loop_body
      %s22 = ssub.s32 %s17, 1
      %s23 = ssub.s32 %s17, 2
      %s33 = sadd.s32 1, %s26
      %p34 = scmp.ge.s32.totalorder %s33, 1
      %s35 = scalar_select %p34, 0, %s33
      %s36 = sadd.s32 1, %s25
      %s37 = scalar_select %p34, %s36, %s25
      %p38 = scmp.ge.s32.totalorder %s37, 1
      %s39 = scalar_select %p38, 0, %s37
      %s40 = sadd.s32 1, %s24
      %s41 = scalar_select %p38, %s40, %s24
      %p42 = scmp.ge.s32.totalorder %s41, 4
      %s43 = scalar_select %p42, 0, %s41
      %s44 = ssub.s32 %s24, %s43
      %s45 = ssub.s32 %s25, %s39
      %s46 = sor.u32 %s44, %s45
      %p47 = scmp.eq.s32.totalorder %s46, 0
      %s49 = sadd.s32 %s48, 1
      %s50 = scalar_select %p47, %s48, %s49
      %p53 = pneg %p47
      %p54 = scmp.eq.s32.totalorder %s17, 3
      %p55 = por %p53, %p54
      %p56 = scmp.ne.s32.totalorder %s48, %s51
      %p57 = scmp.eq.s32.totalorder %s17, 0
      %p58 = por %p56, %p57
      %p59 = scmp.ne.s32.totalorder %s48, %s51
      %p60 = scmp.eq.s32.totalorder %s22, 3
      %p61 = por %p59, %p60
      %p62 = scmp.ne.s32.totalorder %s51, %s52
      %p63 = scmp.eq.s32.totalorder %s22, 0
      %p64 = por %p62, %p63
      %p65 = scmp.ne.s32.totalorder %s51, %s52
      %p66 = scmp.eq.s32.totalorder %s23, 3
      %p67 = por %p65, %p66
      %p69 = scmp.ne.s32.totalorder %s52, %s68
      %p70 = scmp.eq.s32.totalorder %s23, 0
      %p71 = por %p69, %p70
      %s72 = ssub.s32 %s24, %s43
      %s73 = ssub.s32 %s26, %s35
      %s74 = sor.u32 %s72, %s73
      %s75 = ssub.s32 %s25, %s39
      %s76 = sor.u32 %s74, %s75
      %p77 = scmp.eq.s32.totalorder %s76, 0
      %s79 = sadd.s32 %s78, 1
      %s80 = scalar_select %p77, %s78, %s79
      %p83 = pneg %p77
      %p84 = scmp.eq.s32.totalorder %s17, 3
      %p85 = por %p83, %p84
      %p86 = scmp.ne.s32.totalorder %s78, %s81
      %p87 = scmp.eq.s32.totalorder %s17, 0
      %p88 = por %p86, %p87
      %p89 = scmp.ne.s32.totalorder %s78, %s81
      %p90 = scmp.eq.s32.totalorder %s22, 3
      %p91 = por %p89, %p90
      %p92 = scmp.ne.s32.totalorder %s81, %s82
      %p93 = scmp.eq.s32.totalorder %s22, 0
      %p94 = por %p92, %p93
      %p95 = scmp.ne.s32.totalorder %s81, %s82
      %p96 = scmp.eq.s32.totalorder %s23, 3
      %p97 = por %p95, %p96
      %p99 = scmp.ne.s32.totalorder %s82, %s98
      %p100 = scmp.eq.s32.totalorder %s23, 0
      %p101 = por %p99, %p100
      %s102 = ssub.s32 %s24, %s43
      %s103 = ssub.s32 %s26, %s35
      %s104 = sor.u32 %s102, %s103
      %s105 = ssub.s32 %s25, %s39
      %s106 = sor.u32 %s104, %s105
      %p107 = scmp.eq.s32.totalorder %s106, 0
      %s109 = sadd.s32 %s108, 1
      %s110 = scalar_select %p107, %s108, %s109
      %p113 = pneg %p107
      %p114 = scmp.eq.s32.totalorder %s17, 3
      %p115 = por %p113, %p114
      %p116 = scmp.ne.s32.totalorder %s108, %s111
      %p117 = scmp.eq.s32.totalorder %s17, 0
      %p118 = por %p116, %p117
      %p119 = scmp.ne.s32.totalorder %s108, %s111
      %p120 = scmp.eq.s32.totalorder %s22, 3
      %p121 = por %p119, %p120
      %p122 = scmp.ne.s32.totalorder %s111, %s112
      %p123 = scmp.eq.s32.totalorder %s22, 0
      %p124 = por %p122, %p123
      %p125 = scmp.ne.s32.totalorder %s111, %s112
      %p126 = scmp.eq.s32.totalorder %s23, 3
      %p127 = por %p125, %p126
      %p129 = scmp.ne.s32.totalorder %s112, %s128
      %p130 = scmp.eq.s32.totalorder %s23, 0
      %p131 = por %p129, %p130
      %p132 = scmp.le.s32.totalorder 1, %s17
      %p133 = scmp.lt.s32.totalorder %s17, 5
      %p134 = pnand %p132, %p133
      %p135 = pneg %p134
      // Predicated region
      $region9: #{tpu_custom_call.1} parent=5 // pred_check
        _
      $region10: #{tpu_custom_call.1} parent=5 // pred_check_branch
        %137 = sbr.rel (%p134) target = $region12
      $region11: #{tpu_custom_call.1} parent=5 // pred_region
        %s138 = ssub.s32 %s17, 1
      $region12: #{tpu_custom_call.1} parent=5 // pred_fallthru
        _
      %p139 = scmp.lt.s32.totalorder %s17, 4
      // Predicated region
      $region13: #{tpu_custom_call.1} parent=5 // pred_check
        %p140 = pneg %p139
      $region14: #{tpu_custom_call.1} parent=5 // pred_check_branch
        %142 = sbr.rel (%p140) target = $region16
      $region15: #{tpu_custom_call.1} parent=5 // pred_region
        // Predicated region
        $region17: #{tpu_custom_call.1} parent=15 // pred_check
          %p143 = pneg %p58
        $region18: #{tpu_custom_call.1} parent=15 // pred_check_branch
          %145 = sbr.rel (%p143) target = $region20
        $region19: #{tpu_custom_call.1} parent=15 // pred_region
          #allocation9 [shape = 'u32[6]{0}', space=smem, size = 0x18, scoped, tag = 'DMA stride descriptor']
          %s146 = sand.u32 %s48, 1
          %s147 = scalar_lea.sflag [#allocation3], %s146
          %s148 = sand.u32 %s48, 1
          %s149 = smul.addr %s148, 32
          %s150 = scalar_lea.vmem [#allocation2], %s149
          %s152 = ssub.s32 512, 512
          %153 = vsyncadd %s147, %s152
          %s154 = smul.addr %s24, 2
          %s155 = sadd.s32 %s25, %s154
          %s156 = smul.addr %s155, 128
          %s157 = scalar_lea.hbm %s0, %s156
          %s159 = sshll.u32 1, 14
          %s160 = sxor.u32 4294967295, %s159
          %s162 = sld [smem:[#allocation0]]
          %s163 = sadd.s32 2, %s162
          %s165 = sshll.u32 7, 26
          %s166 = sxor.u32 4294967295, %s165
          %s167 = sand.u32 0, %s166
          %s168 = sshll.u32 %s163, 26
          %s169 = sor.u32 %s167, %s168
          %s170 = sshll.u32 %s150, 4
          %s171 = int_to_ptr.vmem [resolvable:$true] %s170
          %177 = sst [smem:[#allocation9]] 1024
          %s178 = scalar_lea.smem [#allocation9], 1
          %179 = sst [smem:[%s178]] 256
          %s180 = scalar_lea.smem [#allocation9], 2
          %181 = sst [smem:[%s180]] 2
          %s182 = scalar_lea.smem [#allocation9], 3
          %183 = sst [smem:[%s182]] 128
          %s184 = scalar_lea.smem [#allocation9], 4
          %185 = sst [smem:[%s184]] 128
          %s186 = scalar_lea.smem [#allocation9], 5
          %187 = sst [smem:[%s186]] 8
          %189 = dma.general %s157, 512, %s171, %s147, 131072, [#allocation9], %s169, 0
        $region20: #{tpu_custom_call.1} parent=15 // pred_fallthru
          _
        // Predicated region
        $region21: #{tpu_custom_call.1} parent=15 // pred_check
          %p190 = pneg %p88
        $region22: #{tpu_custom_call.1} parent=15 // pred_check_branch
          %192 = sbr.rel (%p190) target = $region24
        $region23: #{tpu_custom_call.1} parent=15 // pred_region
          #allocation11 [shape = 'u32[6]{0}', space=smem, size = 0x18, scoped, tag = 'DMA stride descriptor']
          %s193 = sand.u32 %s78, 1
          %s194 = scalar_lea.sflag [#allocation6], %s193
          %s195 = sand.u32 %s78, 1
          %s196 = smul.addr %s195, 128
          %s197 = scalar_lea.vmem [#allocation5], %s196
          %s199 = ssub.s32 2048, 2048
          %200 = vsyncadd %s194, %s199
          %s201 = sadd.s32 %s25, %s26
          %s202 = smul.addr %s24, 8
          %s203 = sadd.s32 %s201, %s202
          %s204 = smul.addr %s203, 128
          %s205 = scalar_lea.hbm %s1, %s204
          %s207 = sshll.u32 1, 14
          %s208 = sxor.u32 4294967295, %s207
          %s210 = sld [smem:[#allocation0]]
          %s211 = sadd.s32 2, %s210
          %s213 = sshll.u32 7, 26
          %s214 = sxor.u32 4294967295, %s213
          %s215 = sand.u32 0, %s214
          %s216 = sshll.u32 %s211, 26
          %s217 = sor.u32 %s215, %s216
          %s218 = sshll.u32 %s197, 4
          %s219 = int_to_ptr.vmem [resolvable:$true] %s218
          %225 = sst [smem:[#allocation11]] 4096
          %s226 = scalar_lea.smem [#allocation11], 1
          %227 = sst [smem:[%s226]] 1024
          %s228 = scalar_lea.smem [#allocation11], 2
          %229 = sst [smem:[%s228]] 8
          %s230 = scalar_lea.smem [#allocation11], 3
          %231 = sst [smem:[%s230]] 128
          %s232 = scalar_lea.smem [#allocation11], 4
          %233 = sst [smem:[%s232]] 128
          %s234 = scalar_lea.smem [#allocation11], 5
          %235 = sst [smem:[%s234]] 8
          %237 = dma.general %s205, 2048, %s219, %s194, 131072, [#allocation11], %s217, 0
        $region24: #{tpu_custom_call.1} parent=15 // pred_fallthru
          _
      $region16: #{tpu_custom_call.1} parent=5 // pred_fallthru
        _
      %p238 = scmp.le.s32.totalorder 1, %s17
      %p239 = scmp.lt.s32.totalorder %s17, 5
      %p240 = pnand %p238, %p239
      %p241 = pneg %p240
      // Predicated region
      $region25: #{tpu_custom_call.1} parent=5 // pred_check
        _
      $region26: #{tpu_custom_call.1} parent=5 // pred_check_branch
        %243 = sbr.rel (%p240) target = $region28
      $region27: #{tpu_custom_call.1} parent=5 // pred_region
        %s244 = ssub.s32 %s17, 1
        %s245 = sand.u32 %s51, 1
        %s246 = scalar_lea.sflag [#allocation3], %s245
        %s247 = sand.u32 %s51, 1
        %s248 = smul.addr %s247, 32
        %s249 = scalar_lea.vmem [#allocation2], %s248
        // Predicated region
        $region29: #{tpu_custom_call.1} parent=27 // pred_check
          %p250 = pneg %p64
        $region30: #{tpu_custom_call.1} parent=27 // pred_check_branch
          %252 = sbr.rel (%p250) target = $region32
        $region31: #{tpu_custom_call.1} parent=27 // pred_region
          %253 = dma.done %s246, 512
        $region32: #{tpu_custom_call.1} parent=27 // pred_fallthru
          _
        %s254 = sand.u32 %s81, 1
        %s255 = scalar_lea.sflag [#allocation6], %s254
        %s256 = sand.u32 %s81, 1
        %s257 = smul.addr %s256, 128
        %s258 = scalar_lea.vmem [#allocation5], %s257
        // Predicated region
        $region33: #{tpu_custom_call.1} parent=27 // pred_check
          %p259 = pneg %p94
        $region34: #{tpu_custom_call.1} parent=27 // pred_check_branch
          %261 = sbr.rel (%p259) target = $region36
        $region35: #{tpu_custom_call.1} parent=27 // pred_region
          %262 = dma.done %s255, 2048
        $region36: #{tpu_custom_call.1} parent=27 // pred_fallthru
          _
        %s263 = sand.u32 %s51, 1
        %s264 = scalar_lea.sflag [#allocation3], %s263
        %s265 = sand.u32 %s51, 1
        %s266 = smul.addr %s265, 32
        %s267 = scalar_lea.vmem [#allocation2], %s266
        %p268 = pneg %p64
        %p269 = pneg %p61
        %s270 = sand.u32 %s81, 1
        %s271 = scalar_lea.sflag [#allocation6], %s270
        %s272 = sand.u32 %s81, 1
        %s273 = smul.addr %s272, 128
        %s274 = scalar_lea.vmem [#allocation5], %s273
        %p275 = pneg %p94
        %p276 = pneg %p91
        %p277 = pneg %p124
        %p278 = pneg %p121
        %s279 = sand.u32 %s111, 1
        %s280 = scalar_lea.sflag [#allocation4], %s279
        %s281 = sand.u32 %s111, 1
        %s282 = smul.addr %s281, 32
        %s283 = scalar_lea.vmem [#allocation7], %s282
        %v284 = vld [vmem:[%s249] sm:$0x1]
        %v285 = vld [vmem:[%s249 + $0x8] sm:$0x1]
        %s286 = scalar_lea.vmem %s249, 16 [#allocation2]
        %v287 = vld [vmem:[%s286] sm:$0x1]
        %v288 = vld [vmem:[%s286 + $0x8] sm:$0x1]
        %v289 = vld [vmem:[%s258] sm:$0xff]
        %s290 = scalar_lea.vmem %s258, 64 [#allocation5]
        %v291 = vld [vmem:[%s290] sm:$0xff]
        %v292 = vlaneseq
        %v293 = vshrl.u32 %v292, 7
        %v294 = vsub.s32 0, %v293
        %v295 = vrot.slane %v284, %v294
        %v296 = vlaneseq
        %v297 = vshrl.u32 %v296, 7
        %v298 = vsub.s32 0, %v297
        %v299 = vrot.slane %v285, %v298
        %v300 = vmul.f32 %v295, %v289
        %v301 = vmul.f32 %v299, %v289
        %v302 = vlaneseq
        %v303 = vshrl.u32 %v302, 7
        %v304 = vsub.s32 0, %v303
        %v305 = vrot.slane %v287, %v304
        %v306 = vlaneseq
        %v307 = vshrl.u32 %v306, 7
        %v308 = vsub.s32 0, %v307
        %v309 = vrot.slane %v288, %v308
        %v310 = vmul.f32 %v305, %v291
        %v311 = vmul.f32 %v309, %v291
        %v312 = vsub.f32 %v300, %v310
        %v313 = vsub.f32 %v301, %v311
        %v314 = vadd.f32 %v312, 0.0
        %v315 = vadd.f32 %v313, 0.0
        %v316 = vmul.f32 %v295, %v291
        %v317 = vmul.f32 %v299, %v291
        %v318 = vmul.f32 %v305, %v289
        %v319 = vmul.f32 %v309, %v289
        %v320 = vadd.f32 %v316, %v318
        %v321 = vadd.f32 %v317, %v319
        %v322 = vadd.f32 %v320, 0.0
        %v323 = vadd.f32 %v321, 0.0
        %v324 = vld [vmem:[%s249 + $0x1] sm:$0x1]
        %v325 = vld [vmem:[%s249 + $0x9] sm:$0x1]
        %v326 = vld [vmem:[%s286 + $0x1] sm:$0x1]
        %v327 = vld [vmem:[%s286 + $0x9] sm:$0x1]
        %s328 = scalar_lea.vmem %s258, 8 [#allocation5]
        %v329 = vld [vmem:[%s328] sm:$0xff]
        %s330 = scalar_lea.vmem %s258, 72 [#allocation5]
        %v331 = vld [vmem:[%s330] sm:$0xff]
        %v332 = vlaneseq
        %v333 = vshrl.u32 %v332, 7
        %v334 = vsub.s32 0, %v333
        %v335 = vrot.slane %v324, %v334
        %v336 = vlaneseq
        %v337 = vshrl.u32 %v336, 7
        %v338 = vsub.s32 0, %v337
        %v339 = vrot.slane %v325, %v338
        %v340 = vmul.f32 %v335, %v329
        %v341 = vmul.f32 %v339, %v329
        %v342 = vlaneseq
        %v343 = vshrl.u32 %v342, 7
        %v344 = vsub.s32 0, %v343
        %v345 = vrot.slane %v326, %v344
        %v346 = vlaneseq
        %v347 = vshrl.u32 %v346, 7
        %v348 = vsub.s32 0, %v347
        %v349 = vrot.slane %v327, %v348
        %v350 = vmul.f32 %v345, %v331
        %v351 = vmul.f32 %v349, %v331
        %v352 = vsub.f32 %v340, %v350
        %v353 = vsub.f32 %v341, %v351
        %v354 = vadd.f32 %v314, %v352
        %v355 = vadd.f32 %v315, %v353
        %v356 = vmul.f32 %v335, %v331
        %v357 = vmul.f32 %v339, %v331
        %v358 = vmul.f32 %v345, %v329
        %v359 = vmul.f32 %v349, %v329
        %v360 = vadd.f32 %v356, %v358
        %v361 = vadd.f32 %v357, %v359
        %v362 = vadd.f32 %v322, %v360
        %v363 = vadd.f32 %v323, %v361
        %v364 = vld [vmem:[%s249 + $0x2] sm:$0x1]
        %v365 = vld [vmem:[%s249 + $0xa] sm:$0x1]
        %v366 = vld [vmem:[%s286 + $0x2] sm:$0x1]
        %v367 = vld [vmem:[%s286 + $0xa] sm:$0x1]
        %s368 = scalar_lea.vmem %s258, 16 [#allocation5]
        %v369 = vld [vmem:[%s368] sm:$0xff]
        %s370 = scalar_lea.vmem %s258, 80 [#allocation5]
        %v371 = vld [vmem:[%s370] sm:$0xff]
        %v372 = vlaneseq
        %v373 = vshrl.u32 %v372, 7
        %v374 = vsub.s32 0, %v373
        %v375 = vrot.slane %v364, %v374
        %v376 = vlaneseq
        %v377 = vshrl.u32 %v376, 7
        %v378 = vsub.s32 0, %v377
        %v379 = vrot.slane %v365, %v378
        %v380 = vmul.f32 %v375, %v369
        %v381 = vmul.f32 %v379, %v369
        %v382 = vlaneseq
        %v383 = vshrl.u32 %v382, 7
        %v384 = vsub.s32 0, %v383
        %v385 = vrot.slane %v366, %v384
        %v386 = vlaneseq
        %v387 = vshrl.u32 %v386, 7
        %v388 = vsub.s32 0, %v387
        %v389 = vrot.slane %v367, %v388
        %v390 = vmul.f32 %v385, %v371
        %v391 = vmul.f32 %v389, %v371
        %v392 = vsub.f32 %v380, %v390
        %v393 = vsub.f32 %v381, %v391
        %v394 = vadd.f32 %v354, %v392
        %v395 = vadd.f32 %v355, %v393
        %v396 = vmul.f32 %v375, %v371
        %v397 = vmul.f32 %v379, %v371
        %v398 = vmul.f32 %v385, %v369
        %v399 = vmul.f32 %v389, %v369
        %v400 = vadd.f32 %v396, %v398
        %v401 = vadd.f32 %v397, %v399
        %v402 = vadd.f32 %v362, %v400
        %v403 = vadd.f32 %v363, %v401
        %v404 = vld [vmem:[%s249 + $0x3] sm:$0x1]
        %v405 = vld [vmem:[%s249 + $0xb] sm:$0x1]
        %v406 = vld [vmem:[%s286 + $0x3] sm:$0x1]
        %v407 = vld [vmem:[%s286 + $0xb] sm:$0x1]
        %s408 = scalar_lea.vmem %s258, 24 [#allocation5]
        %v409 = vld [vmem:[%s408] sm:$0xff]
        %s410 = scalar_lea.vmem %s258, 88 [#allocation5]
        %v411 = vld [vmem:[%s410] sm:$0xff]
        %v412 = vlaneseq
        %v413 = vshrl.u32 %v412, 7
        %v414 = vsub.s32 0, %v413
        %v415 = vrot.slane %v404, %v414
        %v416 = vlaneseq
        %v417 = vshrl.u32 %v416, 7
        %v418 = vsub.s32 0, %v417
        %v419 = vrot.slane %v405, %v418
        %v420 = vmul.f32 %v415, %v409
        %v421 = vmul.f32 %v419, %v409
        %v422 = vlaneseq
        %v423 = vshrl.u32 %v422, 7
        %v424 = vsub.s32 0, %v423
        %v425 = vrot.slane %v406, %v424
        %v426 = vlaneseq
        %v427 = vshrl.u32 %v426, 7
        %v428 = vsub.s32 0, %v427
        %v429 = vrot.slane %v407, %v428
        %v430 = vmul.f32 %v425, %v411
        %v431 = vmul.f32 %v429, %v411
        %v432 = vsub.f32 %v420, %v430
        %v433 = vsub.f32 %v421, %v431
        %v434 = vadd.f32 %v394, %v432
        %v435 = vadd.f32 %v395, %v433
        %v436 = vmul.f32 %v415, %v411
        %v437 = vmul.f32 %v419, %v411
        %v438 = vmul.f32 %v425, %v409
        %v439 = vmul.f32 %v429, %v409
        %v440 = vadd.f32 %v436, %v438
        %v441 = vadd.f32 %v437, %v439
        %v442 = vadd.f32 %v402, %v440
        %v443 = vadd.f32 %v403, %v441
        %v444 = vld [vmem:[%s249 + $0x4] sm:$0x1]
        %v445 = vld [vmem:[%s249 + $0xc] sm:$0x1]
        %v446 = vld [vmem:[%s286 + $0x4] sm:$0x1]
        %v447 = vld [vmem:[%s286 + $0xc] sm:$0x1]
        %s448 = scalar_lea.vmem %s258, 32 [#allocation5]
        %v449 = vld [vmem:[%s448] sm:$0xff]
        %s450 = scalar_lea.vmem %s258, 96 [#allocation5]
        %v451 = vld [vmem:[%s450] sm:$0xff]
        %v452 = vlaneseq
        %v453 = vshrl.u32 %v452, 7
        %v454 = vsub.s32 0, %v453
        %v455 = vrot.slane %v444, %v454
        %v456 = vlaneseq
        %v457 = vshrl.u32 %v456, 7
        %v458 = vsub.s32 0, %v457
        %v459 = vrot.slane %v445, %v458
        %v460 = vmul.f32 %v455, %v449
        %v461 = vmul.f32 %v459, %v449
        %v462 = vlaneseq
        %v463 = vshrl.u32 %v462, 7
        %v464 = vsub.s32 0, %v463
        %v465 = vrot.slane %v446, %v464
        %v466 = vlaneseq
        %v467 = vshrl.u32 %v466, 7
        %v468 = vsub.s32 0, %v467
        %v469 = vrot.slane %v447, %v468
        %v470 = vmul.f32 %v465, %v451
        %v471 = vmul.f32 %v469, %v451
        %v472 = vsub.f32 %v460, %v470
        %v473 = vsub.f32 %v461, %v471
        %v474 = vadd.f32 %v434, %v472
        %v475 = vadd.f32 %v435, %v473
        %v476 = vmul.f32 %v455, %v451
        %v477 = vmul.f32 %v459, %v451
        %v478 = vmul.f32 %v465, %v449
        %v479 = vmul.f32 %v469, %v449
        %v480 = vadd.f32 %v476, %v478
        %v481 = vadd.f32 %v477, %v479
        %v482 = vadd.f32 %v442, %v480
        %v483 = vadd.f32 %v443, %v481
        %v484 = vld [vmem:[%s249 + $0x5] sm:$0x1]
        %v485 = vld [vmem:[%s249 + $0xd] sm:$0x1]
        %v486 = vld [vmem:[%s286 + $0x5] sm:$0x1]
        %v487 = vld [vmem:[%s286 + $0xd] sm:$0x1]
        %s488 = scalar_lea.vmem %s258, 40 [#allocation5]
        %v489 = vld [vmem:[%s488] sm:$0xff]
        %s490 = scalar_lea.vmem %s258, 104 [#allocation5]
        %v491 = vld [vmem:[%s490] sm:$0xff]
        %v492 = vlaneseq
        %v493 = vshrl.u32 %v492, 7
        %v494 = vsub.s32 0, %v493
        %v495 = vrot.slane %v484, %v494
        %v496 = vlaneseq
        %v497 = vshrl.u32 %v496, 7
        %v498 = vsub.s32 0, %v497
        %v499 = vrot.slane %v485, %v498
        %v500 = vmul.f32 %v495, %v489
        %v501 = vmul.f32 %v499, %v489
        %v502 = vlaneseq
        %v503 = vshrl.u32 %v502, 7
        %v504 = vsub.s32 0, %v503
        %v505 = vrot.slane %v486, %v504
        %v506 = vlaneseq
        %v507 = vshrl.u32 %v506, 7
        %v508 = vsub.s32 0, %v507
        %v509 = vrot.slane %v487, %v508
        %v510 = vmul.f32 %v505, %v491
        %v511 = vmul.f32 %v509, %v491
        %v512 = vsub.f32 %v500, %v510
        %v513 = vsub.f32 %v501, %v511
        %v514 = vadd.f32 %v474, %v512
        %v515 = vadd.f32 %v475, %v513
        %v516 = vmul.f32 %v495, %v491
        %v517 = vmul.f32 %v499, %v491
        %v518 = vmul.f32 %v505, %v489
        %v519 = vmul.f32 %v509, %v489
        %v520 = vadd.f32 %v516, %v518
        %v521 = vadd.f32 %v517, %v519
        %v522 = vadd.f32 %v482, %v520
        %v523 = vadd.f32 %v483, %v521
        %v524 = vld [vmem:[%s249 + $0x6] sm:$0x1]
        %v525 = vld [vmem:[%s249 + $0xe] sm:$0x1]
        %v526 = vld [vmem:[%s286 + $0x6] sm:$0x1]
        %v527 = vld [vmem:[%s286 + $0xe] sm:$0x1]
        %s528 = scalar_lea.vmem %s258, 48 [#allocation5]
        %v529 = vld [vmem:[%s528] sm:$0xff]
        %s530 = scalar_lea.vmem %s258, 112 [#allocation5]
        %v531 = vld [vmem:[%s530] sm:$0xff]
        %v532 = vlaneseq
        %v533 = vshrl.u32 %v532, 7
        %v534 = vsub.s32 0, %v533
        %v535 = vrot.slane %v524, %v534
        %v536 = vlaneseq
        %v537 = vshrl.u32 %v536, 7
        %v538 = vsub.s32 0, %v537
        %v539 = vrot.slane %v525, %v538
        %v540 = vmul.f32 %v535, %v529
        %v541 = vmul.f32 %v539, %v529
        %v542 = vlaneseq
        %v543 = vshrl.u32 %v542, 7
        %v544 = vsub.s32 0, %v543
        %v545 = vrot.slane %v526, %v544
        %v546 = vlaneseq
        %v547 = vshrl.u32 %v546, 7
        %v548 = vsub.s32 0, %v547
        %v549 = vrot.slane %v527, %v548
        %v550 = vmul.f32 %v545, %v531
        %v551 = vmul.f32 %v549, %v531
        %v552 = vsub.f32 %v540, %v550
        %v553 = vsub.f32 %v541, %v551
        %v554 = vadd.f32 %v514, %v552
        %v555 = vadd.f32 %v515, %v553
        %v556 = vmul.f32 %v535, %v531
        %v557 = vmul.f32 %v539, %v531
        %v558 = vmul.f32 %v545, %v529
        %v559 = vmul.f32 %v549, %v529
        %v560 = vadd.f32 %v556, %v558
        %v561 = vadd.f32 %v557, %v559
        %v562 = vadd.f32 %v522, %v560
        %v563 = vadd.f32 %v523, %v561
        %v564 = vld [vmem:[%s249 + $0x7] sm:$0x1]
        %v565 = vld [vmem:[%s249 + $0xf] sm:$0x1]
        %v566 = vld [vmem:[%s286 + $0x7] sm:$0x1]
        %v567 = vld [vmem:[%s286 + $0xf] sm:$0x1]
        %s568 = scalar_lea.vmem %s258, 56 [#allocation5]
        %v569 = vld [vmem:[%s568] sm:$0xff]
        %s570 = scalar_lea.vmem %s258, 120 [#allocation5]
        %v571 = vld [vmem:[%s570] sm:$0xff]
        %v572 = vlaneseq
        %v573 = vshrl.u32 %v572, 7
        %v574 = vsub.s32 0, %v573
        %v575 = vrot.slane %v564, %v574
        %v576 = vlaneseq
        %v577 = vshrl.u32 %v576, 7
        %v578 = vsub.s32 0, %v577
        %v579 = vrot.slane %v565, %v578
        %v580 = vmul.f32 %v575, %v569
        %v581 = vmul.f32 %v579, %v569
        %v582 = vlaneseq
        %v583 = vshrl.u32 %v582, 7
        %v584 = vsub.s32 0, %v583
        %v585 = vrot.slane %v566, %v584
        %v586 = vlaneseq
        %v587 = vshrl.u32 %v586, 7
        %v588 = vsub.s32 0, %v587
        %v589 = vrot.slane %v567, %v588
        %v590 = vmul.f32 %v585, %v571
        %v591 = vmul.f32 %v589, %v571
        %v592 = vsub.f32 %v580, %v590
        %v593 = vsub.f32 %v581, %v591
        %v594 = vadd.f32 %v554, %v592
        %v595 = vadd.f32 %v555, %v593
        %v596 = vmul.f32 %v575, %v571
        %v597 = vmul.f32 %v579, %v571
        %v598 = vmul.f32 %v585, %v569
        %v599 = vmul.f32 %v589, %v569
        %v600 = vadd.f32 %v596, %v598
        %v601 = vadd.f32 %v597, %v599
        %v602 = vadd.f32 %v562, %v600
        %v603 = vadd.f32 %v563, %v601
        %604 = vst [vmem:[%s283] sm:$0xff] %v594
        %605 = vst [vmem:[%s283 + $0x8] sm:$0xff] %v595
        %s606 = scalar_lea.vmem %s283, 16 [#allocation7]
        %607 = vst [vmem:[%s606] sm:$0xff] %v602
        %608 = vst [vmem:[%s606 + $0x8] sm:$0xff] %v603
        %s609 = sand.u32 %s111, 1
        %s610 = scalar_lea.sflag [#allocation4], %s609
        %s611 = sand.u32 %s111, 1
        %s612 = smul.addr %s611, 32
        %s613 = scalar_lea.vmem [#allocation7], %s612
        // Predicated region
        $region37: #{tpu_custom_call.1} parent=27 // pred_check
          %p614 = pneg %p121
        $region38: #{tpu_custom_call.1} parent=27 // pred_check_branch
          %616 = sbr.rel (%p614) target = $region40
        $region39: #{tpu_custom_call.1} parent=27 // pred_region
          #allocation13 [shape = 'u32[6]{0}', space=smem, size = 0x18, scoped, tag = 'DMA stride descriptor']
          %s618 = ssub.s32 512, 512
          %619 = vsyncadd %s610, %s618
          %s620 = sadd.s32 %s28, %s29
          %s621 = smul.addr %s27, 2
          %s622 = sadd.s32 %s620, %s621
          %s623 = smul.addr %s622, 128
          %s624 = scalar_lea.hbm %s2, %s623
          %s626 = sshll.u32 1, 14
          %s627 = sxor.u32 4294967295, %s626
          %s630 = sshll.u32 7, 18
          %s631 = sxor.u32 4294967295, %s630
          %s632 = sand.u32 0, %s631
          %s634 = sor.u32 %s632, 0
          %s635 = sshll.u32 %s613, 4
          %s636 = int_to_ptr.vmem [resolvable:$true] %s635
          %642 = sst [smem:[#allocation13]] 256
          %s643 = scalar_lea.smem [#allocation13], 1
          %644 = sst [smem:[%s643]] 1024
          %s645 = scalar_lea.smem [#allocation13], 2
          %646 = sst [smem:[%s645]] 2
          %s647 = scalar_lea.smem [#allocation13], 3
          %648 = sst [smem:[%s647]] 128
          %s649 = scalar_lea.smem [#allocation13], 4
          %650 = sst [smem:[%s649]] 128
          %s651 = scalar_lea.smem [#allocation13], 5
          %652 = sst [smem:[%s651]] 8
          %654 = dma.general %s636, 512, %s624, %s610, 131072, [#allocation13], %s634, 0
        $region40: #{tpu_custom_call.1} parent=27 // pred_fallthru
          _
      $region28: #{tpu_custom_call.1} parent=5 // pred_fallthru
        _
      %p655 = scmp.le.s32.totalorder 2, %s17
      // Predicated region
      $region41: #{tpu_custom_call.1} parent=5 // pred_check
        %p656 = pneg %p655
      $region42: #{tpu_custom_call.1} parent=5 // pred_check_branch
        %658 = sbr.rel (%p656) target = $region44
      $region43: #{tpu_custom_call.1} parent=5 // pred_region
        %s659 = ssub.s32 %s17, 2
        // Predicated region
        $region45: #{tpu_custom_call.1} parent=43 // pred_check
          %p660 = pneg %p127
        $region46: #{tpu_custom_call.1} parent=43 // pred_check_branch
          %662 = sbr.rel (%p660) target = $region48
        $region47: #{tpu_custom_call.1} parent=43 // pred_region
          %s663 = sand.u32 %s112, 1
          %s664 = scalar_lea.sflag [#allocation4], %s663
          %s665 = sand.u32 %s112, 1
          %s666 = smul.addr %s665, 32
          %s667 = scalar_lea.vmem [#allocation7], %s666
          %668 = dma.done %s664, 512
        $region48: #{tpu_custom_call.1} parent=43 // pred_fallthru
          _
      $region44: #{tpu_custom_call.1} parent=5 // pred_fallthru
        _
    $region6: #{tpu_custom_call.1} parent=1 // loop_footer
      %s21 = sadd.s32 1, %s17
    $region7: #{tpu_custom_call.1} parent=1 // loop_footer_branch
      %16 = sbr.rel target = $region3
    $region8: #{tpu_custom_call.1} parent=1 // loop_exit
      _
    %669 = vsyncpa [#allocation3], 1
    %s670 = scalar_lea.sflag [#allocation3], 1
    %671 = vsyncpa %s670, 1
    %672 = vsyncpa [#allocation6], 1
    %s673 = scalar_lea.sflag [#allocation6], 1
    %674 = vsyncpa %s673, 1
    %675 = vsyncpa [#allocation4], 1
    %s676 = scalar_lea.sflag [#allocation4], 1
    %677 = vsyncpa %s676, 1

</llo_original>
